<compile_context>
chip_gen: v5e
topology: v5e:2x2
jax: 0.10.0
libtpu: 0.0.40
codegen_flags: <defaults>
</compile_context>

<pallas_src>
import numpy as np
import jax
import jax.numpy as jnp
from jax.experimental import pallas as pl
from jax.experimental.pallas import tpu as pltpu


# ----------------------------- Pallas kernel --------------------------------
def committor_kernel(xT_ref, w1_ref, b1_ref, w2_ref, o_ref):
    # xT_ref: (d, TB)          VMEM   batch on lanes
    # w1_ref: (N, d)           VMEM   (torch lin1.weight layout, no transpose)
    # b1_ref: (N, 1)           VMEM
    # w2_ref: (N, 1)           VMEM   (transpose of torch lin2.weight)
    # o_ref:  (1, TB)          VMEM   lane-dense output slab
    n_nodes, d = w1_ref.shape

    # --- layer 1: h = relu(W1 @ xT + b1), done as d VPU outer-product MAcs.
    # (K = d = 2 would waste >99% of the MXU and still pay the push/pop path.)
    acc = w1_ref[:, 0:1] * xT_ref[0:1, :]            # (N, 1)*(1, TB) -> (N, TB)
    for k in range(1, d):                            # d is static -> unrolled
        acc = acc + w1_ref[:, k:k + 1] * xT_ref[k:k + 1, :]
    h = jnp.maximum(acc + b1_ref[...], 0.0)          # bias broadcast + relu (VPU)

    # --- layer 2: y = w2^T @ h  (single output row) as VPU mul + XLU reduce.
    y = jnp.sum(h * w2_ref[...], axis=0, keepdims=True)   # (1, TB)

    # --- thresh = sigmoid (EUP), stored lane-dense (unmasked vst).
    o_ref[...] = jax.nn.sigmoid(y)


def committor_forward(x, w1, b1_col, w2_col, *, tb=512):
    """x: (B, d) float32.  Returns (B, 1) float32 = sigmoid(relu(x W1^T + b1) W2^T)."""
    B, d = x.shape
    n_nodes = w1.shape[0]

    # Batch tile: lane-dense (multiple of 128), capped at `tb` (tb % 128 == 0).
    TB = min(tb, ((B + 127) // 128) * 128)
    Bp = pl.cdiv(B, TB) * TB                         # padded batch
    xT = jnp.pad(x, ((0, Bp - B), (0, 0))).T         # (d, Bp): batch on lanes

    yT = pl.pallas_call(
        committor_kernel,
        out_shape=jax.ShapeDtypeStruct((1, Bp), jnp.float32),
        grid=(Bp // TB,),
        in_specs=[
            pl.BlockSpec((d, TB), lambda i: (0, i)),        # x tile marches with grid
            pl.BlockSpec((n_nodes, d), lambda i: (0, 0)),   # weights stay resident
            pl.BlockSpec((n_nodes, 1), lambda i: (0, 0)),
            pl.BlockSpec((n_nodes, 1), lambda i: (0, 0)),
        ],
        out_specs=pl.BlockSpec((1, TB), lambda i: (0, i)),
        compiler_params=pltpu.CompilerParams(
            dimension_semantics=("parallel",),              # shard batch across TCs (v7x)
        ),
    )(xT, w1, b1_col, w2_col)

    return yT[0, :B].reshape(B, 1)


# --------------------------- parameter setup (glue) --------------------------
def project_simplex(v):
    """Euclidean projection of each row of v onto the probability simplex.

    Mirrors the `project_simplex(self.lin2.weight.data)` call in __init__.
    """
    v = np.asarray(v, dtype=np.float64)
    out = np.empty_like(v)
    for i in range(v.shape[0]):
        u = np.sort(v[i])[::-1]
        css = np.cumsum(u)
        k = np.arange(1, u.size + 1)
        cond = u - (css - 1.0) / k > 0
        rho = np.nonzero(cond)[0][-1]
        theta = (css[rho] - 1.0) / (rho + 1.0)
        out[i] = np.maximum(v[i] - theta, 0.0)
    return out.astype(np.float32)


def init_params(key, d, num_nodes):
    """Deterministic init matching nn.Linear's U(-1/sqrt(fan_in), 1/sqrt(fan_in))."""
    k1, k2, k3 = jax.random.split(key, 3)
    bound1 = 1.0 / np.sqrt(d)
    w1 = jax.random.uniform(k1, (num_nodes, d), jnp.float32, -bound1, bound1)
    b1 = jax.random.uniform(k2, (num_nodes,), jnp.float32, -bound1, bound1)
    bound2 = 1.0 / np.sqrt(num_nodes)
    w2 = jax.random.uniform(k3, (1, num_nodes), jnp.float32, -bound2, bound2)
    # __init__ calls self.project(): lin2.weight <- project_simplex(lin2.weight)
    w2 = jnp.asarray(project_simplex(np.asarray(w2)))
    # Kernel layouts: W1 as (num_nodes, d), b1 and W2 as (num_nodes, 1) columns.
    return w1, b1.reshape(num_nodes, 1), w2.T
    # TODO(synk): dist.broadcast() in __init__ is distributed-training glue with
    # no single-device Pallas equivalent; parameters here are already replicated.


def reference_forward(x, w1, b1_col, w2_col):
    """NumPy float32 reference of the PyTorch forward pass."""
    x = np.asarray(x, np.float32)
    h = np.maximum(x @ np.asarray(w1, np.float32).T + np.asarray(b1_col)[:, 0], 0.0)
    y = h @ np.asarray(w2_col, np.float32)
    return 1.0 / (1.0 + np.exp(-y))


# ----------------------------------- main ------------------------------------
if __name__ == "__main__":
    d = 2            # Muller-Brown potential is 2-D
    num_nodes = 32

    key = jax.random.PRNGKey(0)
    kx, kp = jax.random.split(key)
    w1, b1, w2 = init_params(kp, d, num_nodes)

    # batch=8: tiny case (padded to one 128-lane tile);
    # batch=640: exercises the batch grid + padding path (TB=512, 2 grid steps).
    for batch in (8, 640):
        x = jax.random.normal(jax.random.fold_in(kx, batch), (batch, d), jnp.float32)
        out = jax.block_until_ready(committor_forward(x, w1, b1, w2))
        ref = reference_forward(x, w1, b1, w2)
        np.testing.assert_allclose(np.asarray(out), ref, rtol=1e-5, atol=1e-5)
        assert out.shape == (batch, 1)

    print("KERNEL_OK")
</pallas_src>

<mosaic_0001>
module attributes {stable_mosaic.version = 11 : i64} {
  func.func @committor_kernel(%arg0: i32, %arg1: memref<2x128xf32, #tpu.memory_space<vmem>>, %arg2: memref<32x2xf32, #tpu.memory_space<vmem>>, %arg3: memref<32x1xf32, #tpu.memory_space<vmem>>, %arg4: memref<32x1xf32, #tpu.memory_space<vmem>>, %arg5: memref<1x128xf32, #tpu.memory_space<vmem>>) attributes {dimension_semantics = [#tpu.dimension_semantics<parallel>], iteration_bounds = array<i64: 1>, scalar_prefetch = 0 : i64, scratch_operands = 0 : i64, tpu.core_type = #tpu.core_type<tc>, window_params = [{transform_indices = @transform_0, window_bounds = array<i64: 2, 128>}, {pipeline_mode = #tpu.pipeline_mode<synchronous>, transform_indices = @transform_1, window_bounds = array<i64: 32, 2>}, {pipeline_mode = #tpu.pipeline_mode<synchronous>, transform_indices = @transform_2, window_bounds = array<i64: 32, 1>}, {pipeline_mode = #tpu.pipeline_mode<synchronous>, transform_indices = @transform_3, window_bounds = array<i64: 32, 1>}, {transform_indices = @transform_4, window_bounds = array<i64: 1, 128>}]} {
    %c0 = arith.constant 0 : index
    %c0_0 = arith.constant 0 : index
    %0 = vector.load %arg2[%c0, %c0_0] : memref<32x2xf32, #tpu.memory_space<vmem>>, vector<32x1xf32>
    %c0_1 = arith.constant 0 : index
    %c0_2 = arith.constant 0 : index
    %1 = vector.load %arg1[%c0_1, %c0_2] : memref<2x128xf32, #tpu.memory_space<vmem>>, vector<1x128xf32>
    %2 = vector.broadcast %0 : vector<32x1xf32> to vector<32x128xf32>
    %3 = vector.broadcast %1 : vector<1x128xf32> to vector<32x128xf32>
    %4 = arith.mulf %2, %3 : vector<32x128xf32>
    %c0_3 = arith.constant 0 : index
    %c1 = arith.constant 1 : index
    %5 = vector.load %arg2[%c0_3, %c1] : memref<32x2xf32, #tpu.memory_space<vmem>>, vector<32x1xf32>
    %c1_4 = arith.constant 1 : index
    %c0_5 = arith.constant 0 : index
    %6 = vector.load %arg1[%c1_4, %c0_5] : memref<2x128xf32, #tpu.memory_space<vmem>>, vector<1x128xf32>
    %7 = vector.broadcast %5 : vector<32x1xf32> to vector<32x128xf32>
    %8 = vector.broadcast %6 : vector<1x128xf32> to vector<32x128xf32>
    %9 = arith.mulf %7, %8 : vector<32x128xf32>
    %10 = arith.addf %4, %9 : vector<32x128xf32>
    %c0_6 = arith.constant 0 : index
    %c0_7 = arith.constant 0 : index
    %11 = vector.load %arg3[%c0_6, %c0_7] : memref<32x1xf32, #tpu.memory_space<vmem>>, vector<32x1xf32>
    %12 = vector.broadcast %11 : vector<32x1xf32> to vector<32x128xf32>
    %13 = arith.addf %10, %12 : vector<32x128xf32>
    %cst = arith.constant 0.000000e+00 : f32
    %14 = vector.broadcast %cst : f32 to vector<32x128xf32>
    %15 = arith.maximumf %13, %14 : vector<32x128xf32>
    %c0_8 = arith.constant 0 : index
    %c0_9 = arith.constant 0 : index
    %16 = vector.load %arg4[%c0_8, %c0_9] : memref<32x1xf32, #tpu.memory_space<vmem>>, vector<32x1xf32>
    %17 = vector.broadcast %16 : vector<32x1xf32> to vector<32x128xf32>
    %18 = arith.mulf %15, %17 : vector<32x128xf32>
    %cst_10 = arith.constant dense<0.000000e+00> : vector<128xf32>
    %19 = vector.multi_reduction <add>, %18, %cst_10 [0] : vector<32x128xf32> to vector<128xf32>
    %20 = vector.shape_cast %19 : vector<128xf32> to vector<1x128xf32>
    %21 = arith.negf %20 : vector<1x128xf32>
    %22 = math.exp %21 : vector<1x128xf32>
    %cst_11 = arith.constant 1.000000e+00 : f32
    %23 = vector.broadcast %cst_11 : f32 to vector<1x128xf32>
    %24 = arith.addf %23, %22 : vector<1x128xf32>
    %25 = arith.divf %23, %24 : vector<1x128xf32>
    %c0_12 = arith.constant 0 : index
    %c0_13 = arith.constant 0 : index
    %26 = vector.load %arg5[%c0_12, %c0_13] : memref<1x128xf32, #tpu.memory_space<vmem>>, vector<1x128xf32>
    tpu.vector_store %arg5[%c0_12, %c0_13], %25 {strides = array<i32>} : memref<1x128xf32, #tpu.memory_space<vmem>>, vector<1x128xf32>,
    return
  }
  func.func @transform_0(%arg0: i32) -> (i32, i32) {
    %c0_i32 = arith.constant 0 : i32
    %c0_i32_0 = arith.constant 0 : i32
    return %c0_i32, %arg0 : i32, i32
  }
  func.func @transform_1(%arg0: i32) -> (i32, i32) {
    %c0_i32 = arith.constant 0 : i32
    %c0_i32_0 = arith.constant 0 : i32
    %c0_i32_1 = arith.constant 0 : i32
    return %c0_i32, %c0_i32_0 : i32, i32
  }
  func.func @transform_2(%arg0: i32) -> (i32, i32) {
    %c0_i32 = arith.constant 0 : i32
    %c0_i32_0 = arith.constant 0 : i32
    %c0_i32_1 = arith.constant 0 : i32
    return %c0_i32, %c0_i32_0 : i32, i32
  }
  func.func @transform_3(%arg0: i32) -> (i32, i32) {
    %c0_i32 = arith.constant 0 : i32
    %c0_i32_0 = arith.constant 0 : i32
    %c0_i32_1 = arith.constant 0 : i32
    return %c0_i32, %c0_i32_0 : i32, i32
  }
  func.func @transform_4(%arg0: i32) -> (i32, i32) {
    %c0_i32 = arith.constant 0 : i32
    %c0_i32_0 = arith.constant 0 : i32
    return %c0_i32, %arg0 : i32, i32
  }
}

</mosaic_0001>

<llo_original>
// kernel: tpu_custom_call.1
$region0: #{tpu_custom_call.1}
  #allocation0 [shape = 'u32[]', space=smem, size = 0x4, offset = 0x4, fixed_abs, tag = 'smem constant byte address 0x4 - core index']
  #allocation1 [shape = 'u32[72,128]{1,0:T(1,128)}', space=vmem, size = 0x9000, scoped, tag = 'internal scratch']
  %s0 = inlined_call_operand.vmem [shape: f32[2,128], index: 0, kind: input, shape index: {}]
  %s1 = inlined_call_operand.vmem [shape: f32[32,2], index: 1, kind: input, shape index: {}]
  %s2 = inlined_call_operand.vmem [shape: f32[32,1], index: 2, kind: input, shape index: {}]
  %s3 = inlined_call_operand.vmem [shape: f32[32,1], index: 3, kind: input, shape index: {}]
  %s4 = inlined_call_operand.hbm [shape: f32[1,128], index: 4, kind: output, shape index: {}]
  %s5 = sld [smem:[#allocation0]]
  $region26: #{tpu_custom_call.1} parent=0
    _
  %s7 = ssub.s32 1, %s5
  %s8 = scalar_select 0, %s7, %s5
  $region1: #{tpu_custom_call.1} parent=0
    #allocation2 [shape = 'u8[512]{0}', space=vmem, size = 0x400, scoped, tag = 'output window, operand 0, single buffered']
    #allocation3 [shape = 's32[1]{0}', space=sflag, size = 0x4, scoped, tag = 'scoped memory for tpu_custom_call.1']
    %9 = vsyncpa [#allocation3], 0
    // Predicated region
    $region2: #{tpu_custom_call.1} parent=1 // pred_check
      _
    $region3: #{tpu_custom_call.1} parent=1 // pred_check_branch
      %11 = sbr.rel (0) target = $region5
    $region4: #{tpu_custom_call.1} parent=1 // pred_region
      _
    $region5: #{tpu_custom_call.1} parent=1 // pred_fallthru
      _
    // Predicated region
    $region6: #{tpu_custom_call.1} parent=1 // pred_check
      _
    $region7: #{tpu_custom_call.1} parent=1 // pred_check_branch
      %13 = sbr.rel (0) target = $region9
    $region8: #{tpu_custom_call.1} parent=1 // pred_region
      _
    $region9: #{tpu_custom_call.1} parent=1 // pred_fallthru
      _
    // Predicated region
    $region10: #{tpu_custom_call.1} parent=1 // pred_check
      _
    $region11: #{tpu_custom_call.1} parent=1 // pred_check_branch
      %15 = sbr.rel (0) target = $region13
    $region12: #{tpu_custom_call.1} parent=1 // pred_region
      _
    $region13: #{tpu_custom_call.1} parent=1 // pred_fallthru
      _
    // Predicated region
    $region14: #{tpu_custom_call.1} parent=1 // pred_check
      _
    $region15: #{tpu_custom_call.1} parent=1 // pred_check_branch
      %17 = sbr.rel (0) target = $region17
    $region16: #{tpu_custom_call.1} parent=1 // pred_region
      _
    $region17: #{tpu_custom_call.1} parent=1 // pred_fallthru
      _
    %v18 = vld [vmem:[%s1] sm:$0xff]
    %v19 = vld [vmem:[%s1 + $0x8] sm:$0xff]
    %v20 = vld [vmem:[%s1 + $0x10] sm:$0xff]
    %v21 = vld [vmem:[%s1 + $0x18] sm:$0xff]
    %v22 = vld [vmem:[%s0] sm:$0x1]
    %24 = vset.pattern.permute.xlu0 0
    %25 = vperm.xlu0 %24, %v18
    %v26 = vpop.permute.xlu0 %25
    %29 = vset.pattern.permute.xlu0 0
    %30 = vperm.xlu0 %29, %v19
    %v31 = vpop.permute.xlu0 %30
    %34 = vset.pattern.permute.xlu0 0
    %35 = vperm.xlu0 %34, %v20
    %v36 = vpop.permute.xlu0 %35
    %39 = vset.pattern.permute.xlu0 0
    %40 = vperm.xlu0 %39, %v21
    %v41 = vpop.permute.xlu0 %40
    %v43 = vperm.slane %v22, 0
    %v44 = vmul.f32 %v26, %v43
    %v45 = vmul.f32 %v31, %v43
    %v46 = vmul.f32 %v36, %v43
    %v47 = vmul.f32 %v41, %v43
    %v48 = vld [vmem:[%s0 + $0x1] sm:$0x1]
    %49 = vset.pattern.permute.xlu0 1
    %50 = vperm.xlu0 %49, %v18
    %v51 = vpop.permute.xlu0 %50
    %53 = vset.pattern.permute.xlu0 1
    %54 = vperm.xlu0 %53, %v19
    %v55 = vpop.permute.xlu0 %54
    %57 = vset.pattern.permute.xlu0 1
    %58 = vperm.xlu0 %57, %v20
    %v59 = vpop.permute.xlu0 %58
    %61 = vset.pattern.permute.xlu0 1
    %62 = vperm.xlu0 %61, %v21
    %v63 = vpop.permute.xlu0 %62
    %v65 = vperm.slane %v48, 0
    %v66 = vmul.f32 %v51, %v65
    %v67 = vmul.f32 %v55, %v65
    %v68 = vmul.f32 %v59, %v65
    %v69 = vmul.f32 %v63, %v65
    %v70 = vadd.f32 %v44, %v66
    %v71 = vadd.f32 %v45, %v67
    %v72 = vadd.f32 %v46, %v68
    %v73 = vadd.f32 %v47, %v69
    %v74 = vld [vmem:[%s2] sm:$0xff]
    %v75 = vld [vmem:[%s2 + $0x8] sm:$0xff]
    %v76 = vld [vmem:[%s2 + $0x10] sm:$0xff]
    %v77 = vld [vmem:[%s2 + $0x18] sm:$0xff]
    %79 = vset.pattern.permute.xlu0 0
    %80 = vperm.xlu0 %79, %v74
    %v81 = vpop.permute.xlu0 %80
    %84 = vset.pattern.permute.xlu0 0
    %85 = vperm.xlu0 %84, %v75
    %v86 = vpop.permute.xlu0 %85
    %89 = vset.pattern.permute.xlu0 0
    %90 = vperm.xlu0 %89, %v76
    %v91 = vpop.permute.xlu0 %90
    %94 = vset.pattern.permute.xlu0 0
    %95 = vperm.xlu0 %94, %v77
    %v96 = vpop.permute.xlu0 %95
    %v98 = vadd.f32 %v70, %v81
    %v99 = vadd.f32 %v71, %v86
    %v100 = vadd.f32 %v72, %v91
    %v101 = vadd.f32 %v73, %v96
    %v102 = vmax.f32 %v98, 0.0
    %v103 = vmax.f32 %v99, 0.0
    %v104 = vmax.f32 %v100, 0.0
    %v105 = vmax.f32 %v101, 0.0
    %v106 = vld [vmem:[%s3] sm:$0xff]
    %v107 = vld [vmem:[%s3 + $0x8] sm:$0xff]
    %v108 = vld [vmem:[%s3 + $0x10] sm:$0xff]
    %v109 = vld [vmem:[%s3 + $0x18] sm:$0xff]
    %111 = vset.pattern.permute.xlu0 0
    %112 = vperm.xlu0 %111, %v106
    %v113 = vpop.permute.xlu0 %112
    %116 = vset.pattern.permute.xlu0 0
    %117 = vperm.xlu0 %116, %v107
    %v118 = vpop.permute.xlu0 %117
    %121 = vset.pattern.permute.xlu0 0
    %122 = vperm.xlu0 %121, %v108
    %v123 = vpop.permute.xlu0 %122
    %126 = vset.pattern.permute.xlu0 0
    %127 = vperm.xlu0 %126, %v109
    %v128 = vpop.permute.xlu0 %127
    %v130 = vmul.f32 %v102, %v113
    %v131 = vmul.f32 %v103, %v118
    %v132 = vmul.f32 %v104, %v123
    %v133 = vmul.f32 %v105, %v128
    %v134 = vadd.f32 %v130, %v131
    %v135 = vadd.f32 %v134, %v132
    %v136 = vadd.f32 %v135, %v133
    %v137 = vrot.slane %v136, 4
    %v138 = vadd.f32 %v136, %v137
    %v139 = vrot.slane %v138, 2
    %v140 = vadd.f32 %v138, %v139
    %v141 = vrot.slane %v140, 1
    %v142 = vadd.f32 %v140, %v141
    %v143 = vxor.u32 %v142, 2147483648
    %v144 = vmul.f32 %v143, 1.442695
    %v145 = vpow.pop %v144
    %v146 = vadd.f32 %v145, 1.0
    %v147 = vrcp.pop %v146
    %v148 = vmul.f32 %v146, %v147
    %v149 = vsub.f32 1.0, %v148
    %v150 = vmul.f32 %v147, %v149
    %v151 = vadd.f32 %v147, %v150
    %vm152 = vweird.f32 %v146
    %vm153 = vweird.f32 %v147
    %vm154 = vmor %vm152, %vm153
    %v155 = vsel %vm154, %v147, %v151
    %v156 = vand.u32 2147483647, %v146
    %vm157 = vcmp.eq.f32.partialorder %v156, 8.507059e+37
    %v158 = vand.u32 %v146, 2147483648
    %v159 = vor.u32 1.1754944e-38, %v158
    %v160 = vsel %vm157, %v159, %v155
    %v161 = vmul.f32 1.0, %v160
    %162 = vst [vmem:[#allocation2] sm:$0x1] %v161
    // Predicated region
    $region18: #{tpu_custom_call.1} parent=1 // pred_check
      _
    $region19: #{tpu_custom_call.1} parent=1 // pred_check_branch
      %164 = sbr.rel (0) target = $region21
    $region20: #{tpu_custom_call.1} parent=1 // pred_region
      %166 = vsyncadd [#allocation3], 0
      %s168 = sshll.u32 [#allocation2], 4
      %s169 = int_to_ptr.vmem [resolvable:$true] %s168
      %s170 = sshll.u32 %s4, 4
      %s171 = int_to_ptr.hbm [resolvable:$true] %s170
      %173 = dma.vmem_to_hbm [thread:$0]  %s169, 16, %s171, [#allocation3]
    $region21: #{tpu_custom_call.1} parent=1 // pred_fallthru
      _
    // Predicated region
    $region22: #{tpu_custom_call.1} parent=1 // pred_check
      _
    $region23: #{tpu_custom_call.1} parent=1 // pred_check_branch
      %175 = sbr.rel (0) target = $region25
    $region24: #{tpu_custom_call.1} parent=1 // pred_region
      %177 = dma.done [#allocation3], 16
    $region25: #{tpu_custom_call.1} parent=1 // pred_fallthru
      _
    %178 = vsyncpa [#allocation3], 1

</llo_original>
